<compile_context>
chip_gen: v5e
topology: v5e:2x2
jax: 0.10.0
libtpu: 0.0.40
codegen_flags: <defaults>
</compile_context>

<pallas_src>
import math

import numpy as np
import jax
import jax.numpy as jnp
from jax.experimental import pallas as pl
from jax.experimental.pallas import tpu as pltpu


def _round_up(x, m):
    return (x + m - 1) // m * m


# ---------------------------------------------------------------------------
# Pallas kernel: tiled (M,K) @ (K,N) + bias with f32 accumulation
# ---------------------------------------------------------------------------
def _linear_kernel(x_ref, w_ref, b_ref, o_ref, acc_ref):
    k = pl.program_id(2)

    @pl.when(k == 0)
    def _init():
        acc_ref[...] = jnp.zeros_like(acc_ref)

    acc_ref[...] += jnp.dot(x_ref[...], w_ref[...],
                            preferred_element_type=jnp.float32)

    @pl.when(k == pl.num_programs(2) - 1)
    def _store():
        o_ref[...] = (acc_ref[...] + b_ref[...]).astype(o_ref.dtype)


def pallas_linear(x, weight, bias, *, compute_dtype=jnp.bfloat16,
                  tm=256, tn=256, tk=512):
    """y = x @ weight.T + bias  (PyTorch nn.Linear semantics).

    x: (M, K) f32, weight: (N, K) f32, bias: (N,) f32  ->  (M, N) f32.
    Operands are cast to `compute_dtype` (bf16 by default, f32 accumulation);
    pass compute_dtype=None to keep the input dtype.
    """
    M, K = x.shape
    N, K2 = weight.shape
    assert K == K2, (K, K2)

    # Lane/sublane-friendly padding: K, N -> multiples of 128 (lane-dense,
    # unmasked stores and aligned A/B tiles), M -> multiple of 8 sublanes.
    Mp = _round_up(M, 8)
    Kp = _round_up(K, 128)
    Np = _round_up(N, 128)

    # Clamp tiles to the (padded) problem: avoid over-tiling tiny matmuls.
    tm = min(_round_up(tm, 8), Mp)
    tn = min(_round_up(tn, 128), Np)
    tk = min(_round_up(tk, 128), Kp)
    # Make padded extents exact multiples of the chosen tiles.
    Mp = _round_up(Mp, tm)
    Np = _round_up(Np, tn)
    Kp = _round_up(Kp, tk)

    cd = compute_dtype if compute_dtype is not None else x.dtype
    a = jnp.zeros((Mp, Kp), cd).at[:M, :K].set(x.astype(cd))
    w2 = jnp.zeros((Kp, Np), cd).at[:K, :N].set(weight.T.astype(cd))
    b2 = jnp.zeros((1, Np), jnp.float32).at[0, :N].set(bias.astype(jnp.float32))

    grid = (Mp // tm, Np // tn, Kp // tk)

    out = pl.pallas_call(
        _linear_kernel,
        out_shape=jax.ShapeDtypeStruct((Mp, Np), jnp.float32),
        grid=grid,
        in_specs=[
            pl.BlockSpec((tm, tk), lambda i, j, k: (i, k)),
            pl.BlockSpec((tk, tn), lambda i, j, k: (k, j)),
            pl.BlockSpec((1, tn), lambda i, j, k: (0, j)),
        ],
        out_specs=pl.BlockSpec((tm, tn), lambda i, j, k: (i, j)),
        scratch_shapes=[pltpu.VMEM((tm, tn), jnp.float32)],
        compiler_params=pltpu.CompilerParams(
            dimension_semantics=("parallel", "parallel", "arbitrary")),
    )(a, w2, b2)
    return out[:M, :N]


# ---------------------------------------------------------------------------
# feat_classifier: parameters (matching init_weights) and forward
# ---------------------------------------------------------------------------
def init_feat_classifier(key, class_num, bottleneck_dim=256, type='linear'):
    # nn.Linear hit by init_weights: xavier_normal_(weight), zeros_(bias).
    std = math.sqrt(2.0 / (bottleneck_dim + class_num))
    w = std * jax.random.normal(key, (class_num, bottleneck_dim), jnp.float32)
    b = jnp.zeros((class_num,), jnp.float32)
    params = {'type': type, 'bias': b}
    if type == 'wn':
        # weight_norm(name='weight', dim=0): weight = g * v / ||v||_row.
        params['v'] = w
        params['g'] = jnp.linalg.norm(w, axis=1, keepdims=True)
    else:
        params['weight'] = w
    return params


def feat_classifier_forward(params, x, **kwargs):
    if params['type'] == 'wn':
        v, g = params['v'], params['g']
        w = v * (g / jnp.linalg.norm(v, axis=1, keepdims=True))
    else:
        w = params['weight']
    return pallas_linear(x, w, params['bias'], **kwargs)


# ---------------------------------------------------------------------------
if __name__ == "__main__":
    key = jax.random.PRNGKey(0)

    # 1) Small shapes implied by the module: x (batch, bottleneck_dim=256),
    #    class_num=31 (non-multiple-of-128 -> exercises lane padding + slice).
    batch, bottleneck_dim, class_num = 4, 256, 31
    params = init_feat_classifier(jax.random.fold_in(key, 1),
                                  class_num, bottleneck_dim, type='linear')
    x = jax.random.normal(jax.random.fold_in(key, 2),
                          (batch, bottleneck_dim), jnp.float32)
    logits = feat_classifier_forward(params, x)
    jax.block_until_ready(logits)
    assert logits.shape == (batch, class_num)
    ref = x @ params['weight'].T + params['bias']
    np.testing.assert_allclose(np.asarray(logits), np.asarray(ref),
                               rtol=2e-2, atol=2e-2)

    # 2) Larger call exercising the multi-tile grid (M/N parallel, K reduction
    #    with accumulator carry) and the weight-norm variant.
    params2 = init_feat_classifier(jax.random.fold_in(key, 3),
                                   1000, 512, type='wn')
    x2 = jax.random.normal(jax.random.fold_in(key, 4), (300, 512), jnp.float32)
    logits2 = feat_classifier_forward(params2, x2, tm=128, tn=256, tk=256)
    jax.block_until_ready(logits2)
    assert logits2.shape == (300, 1000)
    w_eff = params2['v'] * (params2['g'] /
                            jnp.linalg.norm(params2['v'], axis=1, keepdims=True))
    ref2 = x2 @ w_eff.T + params2['bias']
    np.testing.assert_allclose(np.asarray(logits2), np.asarray(ref2),
                               rtol=2e-2, atol=2e-2)

    print("KERNEL_OK")
</pallas_src>

<mosaic_0001>
module attributes {stable_mosaic.version = 11 : i64} {
  func.func @_linear_kernel(%arg0: i32, %arg1: i32, %arg2: i32, %arg3: memref<8x256xbf16, #tpu.memory_space<vmem>>, %arg4: memref<256x128xbf16, #tpu.memory_space<vmem>>, %arg5: memref<1x128xf32, #tpu.memory_space<vmem>>, %arg6: memref<8x128xf32, #tpu.memory_space<vmem>>, %arg7: memref<8x128xf32, #tpu.memory_space<vmem>>) attributes {dimension_semantics = [#tpu.dimension_semantics<parallel>, #tpu.dimension_semantics<parallel>, #tpu.dimension_semantics<arbitrary>], iteration_bounds = array<i64: 1, 1, 1>, scalar_prefetch = 0 : i64, scratch_operands = 1 : i64, tpu.core_type = #tpu.core_type<tc>, window_params = [{transform_indices = @transform_0, window_bounds = array<i64: 8, 256>}, {transform_indices = @transform_1, window_bounds = array<i64: 256, 128>}, {transform_indices = @transform_2, window_bounds = array<i64: 1, 128>}, {transform_indices = @transform_3, window_bounds = array<i64: 8, 128>}]} {
    %c0_i32 = arith.constant 0 : i32
    %0 = arith.cmpi eq, %arg2, %c0_i32 : i32
    %1 = arith.extui %0 : i1 to i32
    %c0_i32_0 = arith.constant 0 : i32
    %2 = arith.cmpi ne, %1, %c0_i32_0 : i32
    scf.if %2 {
      %cst_10 = arith.constant 0.000000e+00 : f32
      %12 = vector.broadcast %cst_10 : f32 to vector<8x128xf32>
      %c0_11 = arith.constant 0 : index
      %c0_12 = arith.constant 0 : index
      %13 = vector.load %arg7[%c0_11, %c0_12] : memref<8x128xf32, #tpu.memory_space<vmem>>, vector<8x128xf32>
      tpu.vector_store %arg7[%c0_11, %c0_12], %12 {strides = array<i32>} : memref<8x128xf32, #tpu.memory_space<vmem>>, vector<8x128xf32>,
    } else {
    }
    %c0 = arith.constant 0 : index
    %c0_1 = arith.constant 0 : index
    %3 = vector.load %arg7[%c0, %c0_1] : memref<8x128xf32, #tpu.memory_space<vmem>>, vector<8x128xf32>
    %c0_2 = arith.constant 0 : index
    %c0_3 = arith.constant 0 : index
    %4 = vector.load %arg3[%c0_2, %c0_3] : memref<8x256xbf16, #tpu.memory_space<vmem>>, vector<8x256xbf16>
    %c0_4 = arith.constant 0 : index
    %c0_5 = arith.constant 0 : index
    %5 = vector.load %arg4[%c0_4, %c0_5] : memref<256x128xbf16, #tpu.memory_space<vmem>>, vector<256x128xbf16>
    %cst = arith.constant dense<0.000000e+00> : vector<8x128xf32>
    %6 = tpu.matmul %4, %5, %cst {dimension_numbers = #tpu.dot_dimension_numbers<[1], [0], [0], [1], [0, 0, 1, 1], [], []>} : vector<8x256xbf16>, vector<256x128xbf16>, vector<8x128xf32> -> vector<8x128xf32>
    %7 = arith.addf %3, %6 : vector<8x128xf32>
    %c0_6 = arith.constant 0 : index
    %c0_7 = arith.constant 0 : index
    %8 = vector.load %arg7[%c0_6, %c0_7] : memref<8x128xf32, #tpu.memory_space<vmem>>, vector<8x128xf32>
    tpu.vector_store %arg7[%c0_6, %c0_7], %7 {strides = array<i32>} : memref<8x128xf32, #tpu.memory_space<vmem>>, vector<8x128xf32>,
    %c0_i32_8 = arith.constant 0 : i32
    %9 = arith.cmpi eq, %arg2, %c0_i32_8 : i32
    %10 = arith.extui %9 : i1 to i32
    %c0_i32_9 = arith.constant 0 : i32
    %11 = arith.cmpi ne, %10, %c0_i32_9 : i32
    scf.if %11 {
      %c0_10 = arith.constant 0 : index
      %c0_11 = arith.constant 0 : index
      %12 = vector.load %arg7[%c0_10, %c0_11] : memref<8x128xf32, #tpu.memory_space<vmem>>, vector<8x128xf32>
      %c0_12 = arith.constant 0 : index
      %c0_13 = arith.constant 0 : index
      %13 = vector.load %arg5[%c0_12, %c0_13] : memref<1x128xf32, #tpu.memory_space<vmem>>, vector<1x128xf32>
      %14 = vector.broadcast %13 : vector<1x128xf32> to vector<8x128xf32>
      %15 = arith.addf %12, %14 : vector<8x128xf32>
      %c0_14 = arith.constant 0 : index
      %c0_15 = arith.constant 0 : index
      %16 = vector.load %arg6[%c0_14, %c0_15] : memref<8x128xf32, #tpu.memory_space<vmem>>, vector<8x128xf32>
      tpu.vector_store %arg6[%c0_14, %c0_15], %15 {strides = array<i32>} : memref<8x128xf32, #tpu.memory_space<vmem>>, vector<8x128xf32>,
    } else {
    }
    return
  }
  func.func @transform_0(%arg0: i32, %arg1: i32, %arg2: i32) -> (i32, i32) {
    %c0_i32 = arith.constant 0 : i32
    return %arg0, %arg2 : i32, i32
  }
  func.func @transform_1(%arg0: i32, %arg1: i32, %arg2: i32) -> (i32, i32) {
    %c0_i32 = arith.constant 0 : i32
    return %arg2, %arg1 : i32, i32
  }
  func.func @transform_2(%arg0: i32, %arg1: i32, %arg2: i32) -> (i32, i32) {
    %c0_i32 = arith.constant 0 : i32
    %c0_i32_0 = arith.constant 0 : i32
    return %c0_i32, %arg1 : i32, i32
  }
  func.func @transform_3(%arg0: i32, %arg1: i32, %arg2: i32) -> (i32, i32) {
    %c0_i32 = arith.constant 0 : i32
    return %arg0, %arg1 : i32, i32
  }
}

</mosaic_0001>

<llo_original>
// kernel: tpu_custom_call.1
$region0: #{tpu_custom_call.1}
  #allocation0 [shape = 'u32[]', space=smem, size = 0x4, offset = 0x4, fixed_abs, tag = 'smem constant byte address 0x4 - core index']
  #allocation1 [shape = 'u32[72,128]{1,0:T(1,128)}', space=vmem, size = 0x9000, scoped, tag = 'internal scratch']
  #allocation2 [shape = 'f32[8,128]{1,0:T(8,128)}', space=vmem, size = 0x1000, scoped, tag = 'scratch operand']
  %s0 = inlined_call_operand.hbm [shape: bf16[8,256], index: 0, kind: input, shape index: {}]
  %s1 = inlined_call_operand.hbm [shape: bf16[256,128], index: 1, kind: input, shape index: {}]
  %s2 = inlined_call_operand.vmem [shape: f32[1,128], index: 2, kind: input, shape index: {}]
  %s3 = inlined_call_operand.hbm [shape: f32[8,128], index: 3, kind: output, shape index: {}]
  %s4 = sld [smem:[#allocation0]]
  $region38: #{tpu_custom_call.1} parent=0
    _
  %s6 = ssub.s32 1, %s4
  %s7 = scalar_select 0, %s6, %s4
  $region1: #{tpu_custom_call.1} parent=0
    #allocation3 [shape = 'u8[4096]{0}', space=vmem, size = 0x1000, scoped, tag = 'input window, operand 0, single buffered']
    #allocation4 [shape = 's32[1]{0}', space=sflag, size = 0x4, scoped, tag = 'scoped memory for tpu_custom_call.1']
    #allocation5 [shape = 's32[1]{0}', space=sflag, size = 0x4, scoped, tag = 'scoped memory for tpu_custom_call.1']
    #allocation6 [shape = 'u8[65536]{0}', space=vmem, size = 0x10000, scoped, tag = 'input window, operand 1, single buffered']
    #allocation7 [shape = 's32[1]{0}', space=sflag, size = 0x4, scoped, tag = 'scoped memory for tpu_custom_call.1']
    #allocation8 [shape = 'u8[4096]{0}', space=vmem, size = 0x1000, scoped, tag = 'output window, operand 0, single buffered']
    %8 = vsyncpa [#allocation4], 0
    %9 = vsyncpa [#allocation7], 0
    %10 = vsyncpa [#allocation5], 0
    // Predicated region
    $region2: #{tpu_custom_call.1} parent=1 // pred_check
      _
    $region3: #{tpu_custom_call.1} parent=1 // pred_check_branch
      %12 = sbr.rel (0) target = $region5
    $region4: #{tpu_custom_call.1} parent=1 // pred_region
      %14 = vsyncadd [#allocation4], 0
      %s16 = sshll.u32 %s0, 4
      %s17 = int_to_ptr.hbm [resolvable:$true] %s16
      %s18 = sshll.u32 [#allocation3], 4
      %s19 = int_to_ptr.vmem [resolvable:$true] %s18
      %21 = dma.hbm_to_vmem [thread:$0]  %s17, 128, %s19, [#allocation4]
    $region5: #{tpu_custom_call.1} parent=1 // pred_fallthru
      _
    // Predicated region
    $region6: #{tpu_custom_call.1} parent=1 // pred_check
      _
    $region7: #{tpu_custom_call.1} parent=1 // pred_check_branch
      %23 = sbr.rel (0) target = $region9
    $region8: #{tpu_custom_call.1} parent=1 // pred_region
      %25 = vsyncadd [#allocation7], 0
      %s26 = sshll.u32 %s1, 4
      %s27 = int_to_ptr.hbm [resolvable:$true] %s26
      %s28 = sshll.u32 [#allocation6], 4
      %s29 = int_to_ptr.vmem [resolvable:$true] %s28
      %34 = dma.hbm_to_vmem [thread:$0]  %s27, 2048, %s29, [#allocation7], 64, 64, 4
    $region9: #{tpu_custom_call.1} parent=1 // pred_fallthru
      _
    // Predicated region
    $region10: #{tpu_custom_call.1} parent=1 // pred_check
      _
    $region11: #{tpu_custom_call.1} parent=1 // pred_check_branch
      %36 = sbr.rel (0) target = $region13
    $region12: #{tpu_custom_call.1} parent=1 // pred_region
      _
    $region13: #{tpu_custom_call.1} parent=1 // pred_fallthru
      _
    // Predicated region
    $region14: #{tpu_custom_call.1} parent=1 // pred_check
      _
    $region15: #{tpu_custom_call.1} parent=1 // pred_check_branch
      %38 = sbr.rel (0) target = $region17
    $region16: #{tpu_custom_call.1} parent=1 // pred_region
      %40 = dma.done [#allocation4], 128
    $region17: #{tpu_custom_call.1} parent=1 // pred_fallthru
      _
    // Predicated region
    $region18: #{tpu_custom_call.1} parent=1 // pred_check
      _
    $region19: #{tpu_custom_call.1} parent=1 // pred_check_branch
      %42 = sbr.rel (0) target = $region21
    $region20: #{tpu_custom_call.1} parent=1 // pred_region
      %44 = dma.done [#allocation7], 2048
    $region21: #{tpu_custom_call.1} parent=1 // pred_fallthru
      _
    %p45 = scmp.eq.s32.totalorder 0, 0
    // Predicated region
    $region22: #{tpu_custom_call.1} parent=1 // pred_check
      %p46 = pneg %p45
    $region23: #{tpu_custom_call.1} parent=1 // pred_check_branch
      %48 = sbr.rel (%p46) target = $region25
    $region24: #{tpu_custom_call.1} parent=1 // pred_region
      %49 = vst [vmem:[#allocation2] sm:$0xff] 0.0
    $region25: #{tpu_custom_call.1} parent=1 // pred_fallthru
      _
    %v50 = vld [vmem:[#allocation2] sm:$0xff]
    %v51 = vld [vmem:[#allocation3] sm:$0xff]
    %v52 = vld [vmem:[#allocation6] sm:$0xf]
    %v53 = vld [vmem:[#allocation6 + $0x4] sm:$0xf]
    %v54 = vld [vmem:[#allocation6 + $0x8] sm:$0xf]
    %v55 = vld [vmem:[#allocation6 + $0xc] sm:$0xf]
    %v56 = vld [vmem:[#allocation6 + $0x10] sm:$0xf]
    %v57 = vld [vmem:[#allocation6 + $0x14] sm:$0xf]
    %v58 = vld [vmem:[#allocation6 + $0x18] sm:$0xf]
    %v59 = vld [vmem:[#allocation6 + $0x1c] sm:$0xf]
    %v60 = vld [vmem:[#allocation6 + $0x20] sm:$0xf]
    %v61 = vld [vmem:[#allocation6 + $0x24] sm:$0xf]
    %v62 = vld [vmem:[#allocation6 + $0x28] sm:$0xf]
    %v63 = vld [vmem:[#allocation6 + $0x2c] sm:$0xf]
    %v64 = vld [vmem:[#allocation6 + $0x30] sm:$0xf]
    %v65 = vld [vmem:[#allocation6 + $0x34] sm:$0xf]
    %v66 = vld [vmem:[#allocation6 + $0x38] sm:$0xf]
    %v67 = vld [vmem:[#allocation6 + $0x3c] sm:$0xf]
    %v68 = vld [vmem:[#allocation6 + $0x40] sm:$0xf]
    %v69 = vld [vmem:[#allocation6 + $0x44] sm:$0xf]
    %v70 = vld [vmem:[#allocation6 + $0x48] sm:$0xf]
    %v71 = vld [vmem:[#allocation6 + $0x4c] sm:$0xf]
    %v72 = vld [vmem:[#allocation6 + $0x50] sm:$0xf]
    %v73 = vld [vmem:[#allocation6 + $0x54] sm:$0xf]
    %v74 = vld [vmem:[#allocation6 + $0x58] sm:$0xf]
    %v75 = vld [vmem:[#allocation6 + $0x5c] sm:$0xf]
    %v76 = vld [vmem:[#allocation6 + $0x60] sm:$0xf]
    %v77 = vld [vmem:[#allocation6 + $0x64] sm:$0xf]
    %v78 = vld [vmem:[#allocation6 + $0x68] sm:$0xf]
    %v79 = vld [vmem:[#allocation6 + $0x6c] sm:$0xf]
    %v80 = vld [vmem:[#allocation6 + $0x70] sm:$0xf]
    %v81 = vld [vmem:[#allocation6 + $0x74] sm:$0xf]
    %v82 = vld [vmem:[#allocation6 + $0x78] sm:$0xf]
    %v83 = vld [vmem:[#allocation6 + $0x7c] sm:$0xf]
    %v85 = vunpack.c.l.b16 %v51
    %v86 = vunpack.c.h.b16 %v51
    %v87 = vpack.c.b16 %v85, %v85
    %v88 = vpack.c.b16 %v86, %v86
    %v123 = vunpack.c.l.b16 %v52
    %v124 = vunpack.c.l.b16 %v53
    %v125 = vunpack.c.l.b16 %v54
    %v126 = vunpack.c.l.b16 %v55
    %v127 = vunpack.c.l.b16 %v56
    %v128 = vunpack.c.l.b16 %v57
    %v129 = vunpack.c.l.b16 %v58
    %v130 = vunpack.c.l.b16 %v59
    %v131 = vunpack.c.l.b16 %v60
    %v132 = vunpack.c.l.b16 %v61
    %v133 = vunpack.c.l.b16 %v62
    %v134 = vunpack.c.l.b16 %v63
    %v135 = vunpack.c.l.b16 %v64
    %v136 = vunpack.c.l.b16 %v65
    %v137 = vunpack.c.l.b16 %v66
    %v138 = vunpack.c.l.b16 %v67
    %v139 = vunpack.c.l.b16 %v68
    %v140 = vunpack.c.l.b16 %v69
    %v141 = vunpack.c.l.b16 %v70
    %v142 = vunpack.c.l.b16 %v71
    %v143 = vunpack.c.l.b16 %v72
    %v144 = vunpack.c.l.b16 %v73
    %v145 = vunpack.c.l.b16 %v74
    %v146 = vunpack.c.l.b16 %v75
    %v147 = vunpack.c.l.b16 %v76
    %v148 = vunpack.c.l.b16 %v77
    %v149 = vunpack.c.l.b16 %v78
    %v150 = vunpack.c.l.b16 %v79
    %v151 = vunpack.c.l.b16 %v80
    %v152 = vunpack.c.l.b16 %v81
    %v153 = vunpack.c.l.b16 %v82
    %v154 = vunpack.c.l.b16 %v83
    %v155 = vpack.c.b16 %v124, %v123
    %v156 = vpack.c.b16 %v126, %v125
    %v157 = vpack.c.b16 %v128, %v127
    %v158 = vpack.c.b16 %v130, %v129
    %v159 = vpack.c.b16 %v132, %v131
    %v160 = vpack.c.b16 %v134, %v133
    %v161 = vpack.c.b16 %v136, %v135
    %v162 = vpack.c.b16 %v138, %v137
    %v163 = vpack.c.b16 %v140, %v139
    %v164 = vpack.c.b16 %v142, %v141
    %v165 = vpack.c.b16 %v144, %v143
    %v166 = vpack.c.b16 %v146, %v145
    %v167 = vpack.c.b16 %v148, %v147
    %v168 = vpack.c.b16 %v150, %v149
    %v169 = vpack.c.b16 %v152, %v151
    %v170 = vpack.c.b16 %v154, %v153
    %187 = vmatpush.bf16.msra.mxu0 %v162
    %188 = vmatpush.bf16.msra.mxu0 %v161
    %189 = vmatpush.bf16.msra.mxu0 %v160
    %190 = vmatpush.bf16.msra.mxu0 %v159
    %191 = vmatpush.bf16.msra.mxu0 %v158
    %192 = vmatpush.bf16.msra.mxu0 %v157
    %193 = vmatpush.bf16.msra.mxu0 %v156
    %194 = vmatpush.bf16.msra.mxu0 %v155
    %195 = vmatmul.bf16.gmra.mxu0 %v87
    %v196 = vpop.f32.mrf.mxu0
    %v197 = vadd.f32 0.0, %v196
    %v198 = vpop.f32.mrf.mxu0
    %199 = vdwg.mxu0
    %200 = vmatpush.bf16.msra.mxu0 %v170
    %201 = vmatpush.bf16.msra.mxu0 %v169
    %202 = vmatpush.bf16.msra.mxu0 %v168
    %203 = vmatpush.bf16.msra.mxu0 %v167
    %204 = vmatpush.bf16.msra.mxu0 %v166
    %205 = vmatpush.bf16.msra.mxu0 %v165
    %206 = vmatpush.bf16.msra.mxu0 %v164
    %207 = vmatpush.bf16.msra.mxu0 %v163
    %208 = vmatmul.bf16.gmra.mxu0 %v88
    %v209 = vpop.f32.mrf.mxu0
    %v210 = vadd.f32 %v197, %v209
    %v211 = vpop.f32.mrf.mxu0
    %212 = vdwg.mxu0
    %v213 = vadd.f32 %v50, %v210
    %214 = vst [vmem:[#allocation2] sm:$0xff] %v213
    // Predicated region
    $region26: #{tpu_custom_call.1} parent=1 // pred_check
      %p215 = pneg %p45
    $region27: #{tpu_custom_call.1} parent=1 // pred_check_branch
      %217 = sbr.rel (%p215) target = $region29
    $region28: #{tpu_custom_call.1} parent=1 // pred_region
      %v218 = vld [vmem:[#allocation2] sm:$0xff]
      %v219 = vld [vmem:[%s2] sm:$0x1]
      %v221 = vperm.slane %v219, 0
      %v223 = vadd.f32 %v218, %v221
      %224 = vst [vmem:[#allocation8] sm:$0xff] %v223
    $region29: #{tpu_custom_call.1} parent=1 // pred_fallthru
      _
    // Predicated region
    $region30: #{tpu_custom_call.1} parent=1 // pred_check
      _
    $region31: #{tpu_custom_call.1} parent=1 // pred_check_branch
      %226 = sbr.rel (0) target = $region33
    $region32: #{tpu_custom_call.1} parent=1 // pred_region
      %228 = vsyncadd [#allocation5], 0
      %s230 = sshll.u32 [#allocation8], 4
      %s231 = int_to_ptr.vmem [resolvable:$true] %s230
      %s232 = sshll.u32 %s3, 4
      %s233 = int_to_ptr.hbm [resolvable:$true] %s232
      %235 = dma.vmem_to_hbm [thread:$0]  %s231, 128, %s233, [#allocation5]
    $region33: #{tpu_custom_call.1} parent=1 // pred_fallthru
      _
    // Predicated region
    $region34: #{tpu_custom_call.1} parent=1 // pred_check
      _
    $region35: #{tpu_custom_call.1} parent=1 // pred_check_branch
      %237 = sbr.rel (0) target = $region37
    $region36: #{tpu_custom_call.1} parent=1 // pred_region
      %239 = dma.done [#allocation5], 128
    $region37: #{tpu_custom_call.1} parent=1 // pred_fallthru
      _
    %240 = vsyncpa [#allocation4], 1
    %241 = vsyncpa [#allocation7], 1
    %242 = vsyncpa [#allocation5], 1

</llo_original>
